<compile_context>
chip_gen: v6e
topology: v6e:2x2x1
jax: 0.10.0
libtpu: 0.0.40
codegen_flags: <defaults>
</compile_context>

<pallas_src>
import jax
import jax.numpy as jnp
from jax.experimental import pallas as pl
from jax.experimental.pallas import tpu as pltpu


def _round_up(v, m):
    return ((v + m - 1) // m) * m


def _cdiv(a, b):
    return (a + b - 1) // b


def _balanced_tile(dim, cap, align):
    """Tile <= ~cap that keeps padding below `align` elements (no near-full-tile pad)."""
    nt = max(1, _cdiv(dim, cap))
    return _round_up(_cdiv(dim, nt), align)


def _vmem_budget_bytes():
    """Generation-aware scoped-VMEM budget, leaving headroom for compiler scratch."""
    cap = None
    try:
        cap = getattr(pltpu.get_tpu_info(), "vmem_capacity_bytes", None)
    except Exception:
        cap = None
    if cap is None:
        return 48 << 20                                   # safe on v7x's 64 MiB
    if cap >= (96 << 20):                                 # v5e / v6e (128 MiB)
        return min(cap - (16 << 20), 112 << 20)
    return max(min(cap - (12 << 20), 52 << 20), 32 << 20)  # v7x-class (64 MiB)


# ----------------------------------------------------------------------------
# Kernels
# ----------------------------------------------------------------------------
def _linear_single_k_kernel(x_ref, w_ref, b_ref, o_ref):
    # x_ref: (tm, Kp)  w_ref: (Kp, tn)  b_ref: (1, tn)  o_ref: (tm, tn)
    o_ref[...] = (jnp.dot(x_ref[...], w_ref[...],
                          preferred_element_type=jnp.float32)
                  + b_ref[...].astype(jnp.float32)).astype(o_ref.dtype)


def _linear_multi_k_kernel(x_ref, w_ref, b_ref, o_ref, acc_ref):
    # x_ref: (tm, tk)  w_ref: (tk, tn)  b_ref: (1, tn)
    # o_ref: (tm, tn)  acc_ref: (tm, tn) f32
    k = pl.program_id(2)

    @pl.when(k == 0)
    def _():
        # Fold the bias add into the accumulator init.
        acc_ref[...] = jnp.broadcast_to(b_ref[...].astype(jnp.float32),
                                        acc_ref.shape)

    acc_ref[...] += jnp.dot(x_ref[...], w_ref[...],
                            preferred_element_type=jnp.float32)

    @pl.when(k == pl.num_programs(2) - 1)
    def _():
        o_ref[...] = acc_ref[...].astype(o_ref.dtype)


# ----------------------------------------------------------------------------
# Layer wrapper (one-time weight packing, per-call x padding only)
# ----------------------------------------------------------------------------
class LinearRegressionPallas:
    """y = x @ W^T + b.  `weight` is PyTorch-layout (D_out, D_in)."""

    def __init__(self, weight, bias, *, m_cap=512, n_cap=1024, k_cap=1024,
                 compute_dtype=None):
        d_out, d_in = weight.shape
        assert bias.shape == (d_out,)
        self.d_in, self.d_out = d_in, d_out
        self.m_cap = m_cap
        self.compute_dtype = compute_dtype

        self.tile_n = _balanced_tile(d_out, n_cap, 128)
        self.tile_k = _balanced_tile(d_in, k_cap, 128)
        self.Np = _round_up(d_out, self.tile_n)
        self.Kp = _round_up(d_in, self.tile_k)

        # One-time weight transpose (weight-stationary (K, N) layout) + pad.
        w_t = weight.T
        if (self.Kp, self.Np) != (d_in, d_out):
            w_t = jnp.pad(w_t, ((0, self.Kp - d_in), (0, self.Np - d_out)))
        if compute_dtype is not None:
            w_t = w_t.astype(compute_dtype)
        self.w_t = w_t

        b = bias if self.Np == d_out else jnp.pad(bias, (0, self.Np - d_out))
        self.b2d = b.reshape(1, self.Np).astype(jnp.float32)

    def __call__(self, x):
        orig_shape = x.shape
        assert orig_shape[-1] == self.d_in, "input feature mismatch"
        out_dtype = x.dtype

        x2 = x.reshape(-1, self.d_in)
        B = x2.shape[0]

        tile_m = _balanced_tile(B, self.m_cap, 8)
        Bp = _round_up(B, tile_m)

        if self.compute_dtype is not None and x2.dtype != self.compute_dtype:
            x2 = x2.astype(self.compute_dtype)
        if (Bp, self.Kp) != (B, self.d_in):
            x2 = jnp.pad(x2, ((0, Bp - B), (0, self.Kp - self.d_in)))

        tile_n, tile_k = self.tile_n, self.tile_k
        gm, gn, gk = Bp // tile_m, self.Np // tile_n, self.Kp // tile_k

        in_isz = jnp.dtype(x2.dtype).itemsize
        w_isz = jnp.dtype(self.w_t.dtype).itemsize
        out_isz = jnp.dtype(out_dtype).itemsize
        tile_bytes = (
            2 * tile_m * tile_k * in_isz            # x, double-buffered
            + 2 * tile_k * tile_n * w_isz           # w, double-buffered
            + 2 * tile_m * tile_n * out_isz         # out, double-buffered
            + 2 * tile_n * 4                        # bias, double-buffered
            + (tile_m * tile_n * 4 if gk > 1 else 0))  # f32 accumulator
        vmem_limit = int(min(max(tile_bytes + (8 << 20), 24 << 20),
                             _vmem_budget_bytes()))

        if gk == 1:
            out = pl.pallas_call(
                _linear_single_k_kernel,
                out_shape=jax.ShapeDtypeStruct((Bp, self.Np), out_dtype),
                grid_spec=pltpu.PrefetchScalarGridSpec(
                    num_scalar_prefetch=0,
                    grid=(gm, gn),
                    in_specs=[
                        pl.BlockSpec((tile_m, tile_k), lambda i, j: (i, 0)),
                        pl.BlockSpec((tile_k, tile_n), lambda i, j: (0, j)),
                        pl.BlockSpec((1, tile_n), lambda i, j: (0, j)),
                    ],
                    out_specs=pl.BlockSpec((tile_m, tile_n),
                                           lambda i, j: (i, j)),
                ),
                compiler_params=pltpu.CompilerParams(
                    dimension_semantics=("parallel", "parallel"),
                    vmem_limit_bytes=vmem_limit),
            )(x2, self.w_t, self.b2d)
        else:
            out = pl.pallas_call(
                _linear_multi_k_kernel,
                out_shape=jax.ShapeDtypeStruct((Bp, self.Np), out_dtype),
                grid_spec=pltpu.PrefetchScalarGridSpec(
                    num_scalar_prefetch=0,
                    grid=(gm, gn, gk),
                    in_specs=[
                        pl.BlockSpec((tile_m, tile_k), lambda i, j, k: (i, k)),
                        pl.BlockSpec((tile_k, tile_n), lambda i, j, k: (k, j)),
                        pl.BlockSpec((1, tile_n), lambda i, j, k: (0, j)),
                    ],
                    out_specs=pl.BlockSpec((tile_m, tile_n),
                                           lambda i, j, k: (i, j)),
                    scratch_shapes=[pltpu.VMEM((tile_m, tile_n), jnp.float32)],
                ),
                compiler_params=pltpu.CompilerParams(
                    dimension_semantics=("parallel", "parallel", "arbitrary"),
                    vmem_limit_bytes=vmem_limit),
            )(x2, self.w_t, self.b2d)

        out = out[:B, :self.d_out]
        return out.reshape(orig_shape[:-1] + (self.d_out,))


if __name__ == "__main__":
    key = jax.random.PRNGKey(0)
    HIGH = jax.lax.Precision.HIGHEST

    # ---- small case matching LinearRegression(input_dim=32, output_dim=16) --
    B, D_in, D_out = 8, 32, 16
    kx, kw, kb, k2 = jax.random.split(key, 4)
    x = jax.random.normal(kx, (B, D_in), dtype=jnp.float32)
    bound = 1.0 / (D_in ** 0.5)
    weight = jax.random.uniform(kw, (D_out, D_in), minval=-bound, maxval=bound,
                                dtype=jnp.float32)
    bias = jax.random.uniform(kb, (D_out,), minval=-bound, maxval=bound,
                              dtype=jnp.float32)

    layer = LinearRegressionPallas(weight, bias)
    y = layer(x)
    jax.block_until_ready(y)
    y_ref = jnp.dot(x, weight.T, precision=HIGH) + bias
    assert y.shape == y_ref.shape
    assert jnp.allclose(y, y_ref, atol=1e-5, rtol=1e-5)

    # ---- ragged multi-tile case (balanced padding + multi-K accumulation) ---
    B2, Din2, Dout2 = 260, 1300, 272
    kx2, kw2, kb2 = jax.random.split(k2, 3)
    x2 = jax.random.normal(kx2, (B2, Din2), dtype=jnp.float32)
    bound2 = 1.0 / (Din2 ** 0.5)
    w2 = jax.random.uniform(kw2, (Dout2, Din2), minval=-bound2, maxval=bound2,
                            dtype=jnp.float32)
    b2 = jax.random.uniform(kb2, (Dout2,), minval=-bound2, maxval=bound2,
                            dtype=jnp.float32)

    layer2 = LinearRegressionPallas(w2, b2)
    y2 = layer2(x2)
    jax.block_until_ready(y2)
    y2_ref = jnp.dot(x2, w2.T, precision=HIGH) + b2
    assert y2.shape == y2_ref.shape
    assert jnp.allclose(y2, y2_ref, atol=1e-4, rtol=1e-4)

    print("KERNEL_OK")
</pallas_src>

<mosaic_0001>
module attributes {stable_mosaic.version = 11 : i64} {
  func.func @_linear_single_k_kernel(%arg0: i32, %arg1: i32, %arg2: memref<8x128xf32, #tpu.memory_space<vmem>>, %arg3: memref<128x128xf32, #tpu.memory_space<vmem>>, %arg4: memref<1x128xf32, #tpu.memory_space<vmem>>, %arg5: memref<8x128xf32, #tpu.memory_space<vmem>>) attributes {dimension_semantics = [#tpu.dimension_semantics<parallel>, #tpu.dimension_semantics<parallel>], iteration_bounds = array<i64: 1, 1>, scalar_prefetch = 0 : i64, scratch_operands = 0 : i64, tpu.core_type = #tpu.core_type<tc>, window_params = [{transform_indices = @transform_0, window_bounds = array<i64: 8, 128>}, {transform_indices = @transform_1, window_bounds = array<i64: 128, 128>}, {transform_indices = @transform_2, window_bounds = array<i64: 1, 128>}, {transform_indices = @transform_3, window_bounds = array<i64: 8, 128>}]} {
    %c0 = arith.constant 0 : index
    %c0_0 = arith.constant 0 : index
    %0 = vector.load %arg2[%c0, %c0_0] : memref<8x128xf32, #tpu.memory_space<vmem>>, vector<8x128xf32>
    %c0_1 = arith.constant 0 : index
    %c0_2 = arith.constant 0 : index
    %1 = vector.load %arg3[%c0_1, %c0_2] : memref<128x128xf32, #tpu.memory_space<vmem>>, vector<128x128xf32>
    %cst = arith.constant dense<0.000000e+00> : vector<8x128xf32>
    %2 = tpu.matmul %0, %1, %cst {dimension_numbers = #tpu.dot_dimension_numbers<[1], [0], [0], [1], [0, 0, 1, 1], [], []>} : vector<8x128xf32>, vector<128x128xf32>, vector<8x128xf32> -> vector<8x128xf32>
    %c0_3 = arith.constant 0 : index
    %c0_4 = arith.constant 0 : index
    %3 = vector.load %arg4[%c0_3, %c0_4] : memref<1x128xf32, #tpu.memory_space<vmem>>, vector<1x128xf32>
    %4 = vector.broadcast %3 : vector<1x128xf32> to vector<8x128xf32>
    %5 = arith.addf %2, %4 : vector<8x128xf32>
    %c0_5 = arith.constant 0 : index
    %c0_6 = arith.constant 0 : index
    %6 = vector.load %arg5[%c0_5, %c0_6] : memref<8x128xf32, #tpu.memory_space<vmem>>, vector<8x128xf32>
    tpu.vector_store %arg5[%c0_5, %c0_6], %5 {strides = array<i32>} : memref<8x128xf32, #tpu.memory_space<vmem>>, vector<8x128xf32>,
    return
  }
  func.func @transform_0(%arg0: i32, %arg1: i32) -> (i32, i32) {
    %c0_i32 = arith.constant 0 : i32
    %c0_i32_0 = arith.constant 0 : i32
    return %arg0, %c0_i32 : i32, i32
  }
  func.func @transform_1(%arg0: i32, %arg1: i32) -> (i32, i32) {
    %c0_i32 = arith.constant 0 : i32
    %c0_i32_0 = arith.constant 0 : i32
    return %c0_i32, %arg1 : i32, i32
  }
  func.func @transform_2(%arg0: i32, %arg1: i32) -> (i32, i32) {
    %c0_i32 = arith.constant 0 : i32
    %c0_i32_0 = arith.constant 0 : i32
    return %c0_i32, %arg1 : i32, i32
  }
  func.func @transform_3(%arg0: i32, %arg1: i32) -> (i32, i32) {
    %c0_i32 = arith.constant 0 : i32
    return %arg0, %arg1 : i32, i32
  }
}

</mosaic_0001>

<llo_original>
// kernel: tpu_custom_call.1
$region0: #{tpu_custom_call.1}
  #allocation0 [shape = 'u32[]', space=smem, size = 0x4, offset = 0x4, fixed_abs, tag = 'smem constant byte address 0x4 - core index']
  #allocation1 [shape = 'u32[144,128]{1,0:T(1,128)}', space=vmem, size = 0x12000, scoped, tag = 'internal scratch']
  %s0 = inlined_call_operand.hbm [shape: f32[8,128], index: 0, kind: input, shape index: {}]
  %s1 = inlined_call_operand.hbm [shape: f32[128,128], index: 1, kind: input, shape index: {}]
  %s2 = inlined_call_operand.vmem [shape: f32[1,128], index: 2, kind: input, shape index: {}]
  %s3 = inlined_call_operand.hbm [shape: f32[8,128], index: 3, kind: output, shape index: {}]
  %s4 = sld [smem:[#allocation0]]
  $region30: #{tpu_custom_call.1} parent=0
    _
  %s6 = ssub.s32 1, %s4
  %s7 = scalar_select 0, %s6, %s4
  $region1: #{tpu_custom_call.1} parent=0
    #allocation2 [shape = 'u8[4096]{0}', space=vmem, size = 0x1000, scoped, tag = 'input window, operand 0, single buffered']
    #allocation3 [shape = 's32[1]{0}', space=sflag, size = 0x4, scoped, tag = 'scoped memory for tpu_custom_call.1']
    #allocation4 [shape = 's32[1]{0}', space=sflag, size = 0x4, scoped, tag = 'scoped memory for tpu_custom_call.1']
    #allocation5 [shape = 'u8[65536]{0}', space=vmem, size = 0x10000, scoped, tag = 'input window, operand 1, single buffered']
    #allocation6 [shape = 's32[1]{0}', space=sflag, size = 0x4, scoped, tag = 'scoped memory for tpu_custom_call.1']
    #allocation7 [shape = 'u8[4096]{0}', space=vmem, size = 0x1000, scoped, tag = 'output window, operand 0, single buffered']
    %8 = vsyncpa [#allocation3], 0
    %9 = vsyncpa [#allocation6], 0
    %10 = vsyncpa [#allocation4], 0
    // Predicated region
    $region2: #{tpu_custom_call.1} parent=1 // pred_check
      _
    $region3: #{tpu_custom_call.1} parent=1 // pred_check_branch
      %12 = sbr.rel (0) target = $region5
    $region4: #{tpu_custom_call.1} parent=1 // pred_region
      %s14 = ssub.s32 128, 128
      %15 = vsyncadd [#allocation3], %s14
      %s17 = sshll.u32 [#allocation2], 4
      %s18 = int_to_ptr.vmem [resolvable:$true] %s17
      %20 = dma.hbm_to_vmem [thread:$0]  %s0, 128, %s18, [#allocation3]
    $region5: #{tpu_custom_call.1} parent=1 // pred_fallthru
      _
    // Predicated region
    $region6: #{tpu_custom_call.1} parent=1 // pred_check
      _
    $region7: #{tpu_custom_call.1} parent=1 // pred_check_branch
      %22 = sbr.rel (0) target = $region9
    $region8: #{tpu_custom_call.1} parent=1 // pred_region
      %s24 = ssub.s32 2048, 2048
      %25 = vsyncadd [#allocation6], %s24
      %s26 = sshll.u32 [#allocation5], 4
      %s27 = int_to_ptr.vmem [resolvable:$true] %s26
      %32 = dma.hbm_to_vmem [thread:$0]  %s1, 2048, %s27, [#allocation6], 128, 128, 8
    $region9: #{tpu_custom_call.1} parent=1 // pred_fallthru
      _
    // Predicated region
    $region10: #{tpu_custom_call.1} parent=1 // pred_check
      _
    $region11: #{tpu_custom_call.1} parent=1 // pred_check_branch
      %34 = sbr.rel (0) target = $region13
    $region12: #{tpu_custom_call.1} parent=1 // pred_region
      _
    $region13: #{tpu_custom_call.1} parent=1 // pred_fallthru
      _
    // Predicated region
    $region14: #{tpu_custom_call.1} parent=1 // pred_check
      _
    $region15: #{tpu_custom_call.1} parent=1 // pred_check_branch
      %36 = sbr.rel (0) target = $region17
    $region16: #{tpu_custom_call.1} parent=1 // pred_region
      %37 = dma.done [#allocation3], 128
    $region17: #{tpu_custom_call.1} parent=1 // pred_fallthru
      _
    // Predicated region
    $region18: #{tpu_custom_call.1} parent=1 // pred_check
      _
    $region19: #{tpu_custom_call.1} parent=1 // pred_check_branch
      %39 = sbr.rel (0) target = $region21
    $region20: #{tpu_custom_call.1} parent=1 // pred_region
      %40 = dma.done [#allocation6], 2048
    $region21: #{tpu_custom_call.1} parent=1 // pred_fallthru
      _
    %v41 = vld [vmem:[#allocation2] sm:$0xff]
    %v42 = vld [vmem:[#allocation5] sm:$0xff]
    %v43 = vld [vmem:[#allocation5 + $0x8] sm:$0xff]
    %v44 = vld [vmem:[#allocation5 + $0x10] sm:$0xff]
    %v45 = vld [vmem:[#allocation5 + $0x18] sm:$0xff]
    %v46 = vld [vmem:[#allocation5 + $0x20] sm:$0xff]
    %v47 = vld [vmem:[#allocation5 + $0x28] sm:$0xff]
    %v48 = vld [vmem:[#allocation5 + $0x30] sm:$0xff]
    %v49 = vld [vmem:[#allocation5 + $0x38] sm:$0xff]
    %v50 = vld [vmem:[#allocation5 + $0x40] sm:$0xff]
    %v51 = vld [vmem:[#allocation5 + $0x48] sm:$0xff]
    %v52 = vld [vmem:[#allocation5 + $0x50] sm:$0xff]
    %v53 = vld [vmem:[#allocation5 + $0x58] sm:$0xff]
    %v54 = vld [vmem:[#allocation5 + $0x60] sm:$0xff]
    %v55 = vld [vmem:[#allocation5 + $0x68] sm:$0xff]
    %v56 = vld [vmem:[#allocation5 + $0x70] sm:$0xff]
    %v57 = vld [vmem:[#allocation5 + $0x78] sm:$0xff]
    %v58 = vld [vmem:[%s2] sm:$0x1]
    %v60 = vlaneseq
    %v61 = vshrl.u32 %v60, 7
    %v62 = vsub.s32 0, %v61
    %v63 = vrot.slane %v58, %v62
    %65 = vmatprep.subr.mxu0 0.0
    %66 = vmatpush1.msra.mxu0 %v57
    %67 = vmatprep.subr.mxu0 0.0
    %68 = vmatpush1.msra.mxu0 %v56
    %69 = vmatprep.subr.mxu0 0.0
    %70 = vmatpush1.msra.mxu0 %v55
    %71 = vmatprep.subr.mxu0 0.0
    %72 = vmatpush1.msra.mxu0 %v54
    %73 = vmatprep.subr.mxu0 0.0
    %74 = vmatpush1.msra.mxu0 %v53
    %75 = vmatprep.subr.mxu0 0.0
    %76 = vmatpush1.msra.mxu0 %v52
    %77 = vmatprep.subr.mxu0 0.0
    %78 = vmatpush1.msra.mxu0 %v51
    %79 = vmatprep.subr.mxu0 0.0
    %80 = vmatpush1.msra.mxu0 %v50
    %81 = vmatprep.subr.mxu0 0.0
    %82 = vmatpush1.msra.mxu0 %v49
    %83 = vmatprep.subr.mxu0 0.0
    %84 = vmatpush1.msra.mxu0 %v48
    %85 = vmatprep.subr.mxu0 0.0
    %86 = vmatpush1.msra.mxu0 %v47
    %87 = vmatprep.subr.mxu0 0.0
    %88 = vmatpush1.msra.mxu0 %v46
    %89 = vmatprep.subr.mxu0 0.0
    %90 = vmatpush1.msra.mxu0 %v45
    %91 = vmatprep.subr.mxu0 0.0
    %92 = vmatpush1.msra.mxu0 %v44
    %93 = vmatprep.subr.mxu0 0.0
    %94 = vmatpush1.msra.mxu0 %v43
    %95 = vmatprep.subr.mxu0 0.0
    %96 = vmatpush1.msra.mxu0 %v42
    %97 = vmatprep.subr.mxu0 0.0
    %98 = vmatpush2.msra.mxu0 0.0
    %99 = vmatprep.subr.mxu0 0.0
    %100 = vmatpush2.msra.mxu0 0.0
    %101 = vmatprep.subr.mxu0 0.0
    %102 = vmatpush2.msra.mxu0 0.0
    %103 = vmatprep.subr.mxu0 0.0
    %104 = vmatpush2.msra.mxu0 0.0
    %105 = vmatprep.subr.mxu0 0.0
    %106 = vmatpush2.msra.mxu0 0.0
    %107 = vmatprep.subr.mxu0 0.0
    %108 = vmatpush2.msra.mxu0 0.0
    %109 = vmatprep.subr.mxu0 0.0
    %110 = vmatpush2.msra.mxu0 0.0
    %111 = vmatprep.subr.mxu0 0.0
    %112 = vmatpush2.msra.mxu0 0.0
    %113 = vmatprep.subr.mxu0 0.0
    %114 = vmatpush2.msra.mxu0 0.0
    %115 = vmatprep.subr.mxu0 0.0
    %116 = vmatpush2.msra.mxu0 0.0
    %117 = vmatprep.subr.mxu0 0.0
    %118 = vmatpush2.msra.mxu0 0.0
    %119 = vmatprep.subr.mxu0 0.0
    %120 = vmatpush2.msra.mxu0 0.0
    %121 = vmatprep.subr.mxu0 0.0
    %122 = vmatpush2.msra.mxu0 0.0
    %123 = vmatprep.subr.mxu0 0.0
    %124 = vmatpush2.msra.mxu0 0.0
    %125 = vmatprep.subr.mxu0 0.0
    %126 = vmatpush2.msra.mxu0 0.0
    %127 = vmatprep.subr.mxu0 0.0
    %128 = vmatpush2.msra.mxu0 0.0
    %129 = vmatprep.mubr.f32.mxu0 0.0
    %130 = vmatmul.mubr.f32.gmra.mxu0 %v41
    %v131 = vpop.f32.mrf.mxu0
    %v132 = vadd.f32 %v63, %v131
    %v133 = vpop.f32.mrf.mxu0
    %134 = vdwg.mxu0
    %135 = vst [vmem:[#allocation7] sm:$0xff] %v132
    // Predicated region
    $region22: #{tpu_custom_call.1} parent=1 // pred_check
      _
    $region23: #{tpu_custom_call.1} parent=1 // pred_check_branch
      %137 = sbr.rel (0) target = $region25
    $region24: #{tpu_custom_call.1} parent=1 // pred_region
      %s139 = ssub.s32 128, 128
      %140 = vsyncadd [#allocation4], %s139
      %s142 = sshll.u32 [#allocation7], 4
      %s143 = int_to_ptr.vmem [resolvable:$true] %s142
      %145 = dma.vmem_to_hbm [thread:$0]  %s143, 128, %s3, [#allocation4]
    $region25: #{tpu_custom_call.1} parent=1 // pred_fallthru
      _
    // Predicated region
    $region26: #{tpu_custom_call.1} parent=1 // pred_check
      _
    $region27: #{tpu_custom_call.1} parent=1 // pred_check_branch
      %147 = sbr.rel (0) target = $region29
    $region28: #{tpu_custom_call.1} parent=1 // pred_region
      %148 = dma.done [#allocation4], 128
    $region29: #{tpu_custom_call.1} parent=1 // pred_fallthru
      _
    %149 = vsyncpa [#allocation3], 1
    %150 = vsyncpa [#allocation6], 1
    %151 = vsyncpa [#allocation4], 1

</llo_original>
